<compile_context>
chip_gen: v7x
topology: tpu7x:2x2x1
jax: 0.10.0
libtpu: 0.0.40
codegen_flags: <defaults>
</compile_context>

<pallas_src>
import jax
import jax.numpy as jnp
from jax.experimental import pallas as pl
from jax.experimental.pallas import tpu as pltpu


def _round_up(x, m):
    return ((x + m - 1) // m) * m


def _pad2(a, d0, d1):
    return jnp.pad(a, ((0, d0 - a.shape[0]), (0, d1 - a.shape[1])))


def linear_mse_pallas(x, w, b, y):
    """Scalar MSE(x @ w + b, y), hot path (matmul + squared error) in Pallas."""
    B, H = x.shape
    H2, O = w.shape
    assert H2 == H and y.shape == (B, O) and b.shape == (1, O)

    # Lane/MXU-friendly padded feature dims.
    Hp = _round_up(H, 128)
    Op = _round_up(O, 128)

    # Batch tile size from a conservative VMEM budget (safe on v5e/v6e/v7x):
    # resident w/b + 2x double-buffered (x bf16 + y f32) row tiles.
    budget = 24 * 1024 * 1024
    resident = Hp * Op * 2 + Op * 4
    per_row = 2 * (Hp * 2 + Op * 4)
    tb = (budget - resident) // max(per_row, 1)
    tb = max(8, min(512, (tb // 8) * 8))
    tb = min(tb, _round_up(B, 8))
    nblk = pl.cdiv(B, tb)
    Bp = nblk * tb

    x_p = _pad2(x.astype(jnp.float32), Bp, Hp).astype(jnp.bfloat16)
    w_p = _pad2(w.astype(jnp.float32), Hp, Op).astype(jnp.bfloat16)
    b_p = _pad2(b.astype(jnp.float32), 1, Op)
    y_p = _pad2(y.astype(jnp.float32), Bp, Op)

    need_row_mask = (Bp != B)  # padded batch rows must not contribute
    # Padded feature columns contribute 0 automatically (w, b, y zero-padded).

    def kernel(x_ref, w_ref, b_ref, y_ref, out_ref):
        # MXU matmul in bf16, f32 accumulate.
        pred = jnp.dot(x_ref[...], w_ref[...],
                       preferred_element_type=jnp.float32)
        diff = (pred + b_ref[...]) - y_ref[...]          # f32 VPU math
        sq = diff * diff
        if need_row_mask:
            rows = (pl.program_id(0) * tb
                    + jax.lax.broadcasted_iota(jnp.int32, sq.shape, 0))
            sq = jnp.where(rows < B, sq, 0.0)
        # Fold batch rows in groups of 8 sublanes -> lane-dense (8, Op) partial.
        out_ref[0] = jnp.sum(sq.reshape(tb // 8, 8, Op), axis=0)

    cost = pl.CostEstimate(
        flops=2 * Bp * Hp * Op,
        transcendentals=0,
        bytes_accessed=(Bp * Hp * 2 + Hp * Op * 2 + Op * 4
                        + Bp * Op * 4 + nblk * 8 * Op * 4),
    )

    partials = pl.pallas_call(
        kernel,
        out_shape=jax.ShapeDtypeStruct((nblk, 8, Op), jnp.float32),
        grid_spec=pltpu.PrefetchScalarGridSpec(
            num_scalar_prefetch=0,
            grid=(nblk,),
            in_specs=[
                pl.BlockSpec((tb, Hp), lambda i: (i, 0)),   # x  (streamed)
                pl.BlockSpec((Hp, Op), lambda i: (0, 0)),   # w  (resident)
                pl.BlockSpec((1, Op), lambda i: (0, 0)),    # b  (resident)
                pl.BlockSpec((tb, Op), lambda i: (i, 0)),   # y  (streamed)
            ],
            out_specs=pl.BlockSpec((1, 8, Op), lambda i: (i, 0, 0)),
        ),
        compiler_params=pltpu.CompilerParams(
            dimension_semantics=("parallel",),
            vmem_limit_bytes=64 * 1024 * 1024,
        ),
        cost_estimate=cost,
    )(x_p, w_p, b_p, y_p)

    # Final (tiny) reduction + mean normalization in the wrapper.
    return jnp.sum(partials) / (B * O)


class DictInputWarpper:
    """JAX/Pallas port of the PyTorch DictInputWarpper.

    forward(dict_input, dict_targets):
        inputs  = dict_input[self.input_name]
        targets = dict_targets[self.target_name]
        return self.module(inputs, targets)
    """

    def __init__(self, module, input_name, target_name):
        self.module = module
        self.input_name = input_name
        self.target_name = target_name

    def __call__(self, dict_input, dict_targets):
        inputs = dict_input[self.input_name]
        targets = dict_targets[self.target_name]
        return self.module(inputs, targets)


class LinearMSEModule:
    """Concrete inner module: Linear(H, O) + MSE loss, hot path in Pallas."""

    def __init__(self, hidden, out_dim, key):
        kw, kb = jax.random.split(key)
        self.w = (jax.random.normal(kw, (hidden, out_dim), jnp.float32)
                  * (1.0 / jnp.sqrt(hidden)))
        self.b = jax.random.normal(kb, (1, out_dim), jnp.float32) * 0.01

    def __call__(self, inputs, targets):
        return linear_mse_pallas(inputs, self.w, self.b, targets)


if __name__ == "__main__":
    B, H, O = 8, 32, 16
    key = jax.random.PRNGKey(0)
    k_x, k_y, k_p = jax.random.split(key, 3)

    x = jax.random.normal(k_x, (B, H), jnp.float32)
    y = jax.random.normal(k_y, (B, O), jnp.float32)

    inner = LinearMSEModule(H, O, k_p)
    wrapped = DictInputWarpper(inner, input_name="features", target_name="labels")

    dict_input = {"features": x}
    dict_targets = {"labels": y}

    loss = wrapped(dict_input, dict_targets)
    loss = jax.block_until_ready(loss)

    # Pure-JAX f32 reference of the inner module (kernel uses bf16 MXU inputs,
    # f32 accumulation/elementwise, so allow a small tolerance).
    pred_ref = x @ inner.w + inner.b
    loss_ref = jnp.mean((pred_ref - y) ** 2)
    assert jnp.allclose(loss, loss_ref, rtol=2e-2, atol=2e-2), (loss, loss_ref)

    print("KERNEL_OK")
</pallas_src>

<mosaic_0001>
module attributes {stable_mosaic.version = 11 : i64} {
  func.func @kernel(%arg0: i32, %arg1: memref<8x128xbf16, #tpu.memory_space<vmem>>, %arg2: memref<128x128xbf16, #tpu.memory_space<vmem>>, %arg3: memref<1x128xf32, #tpu.memory_space<vmem>>, %arg4: memref<8x128xf32, #tpu.memory_space<vmem>>, %arg5: memref<1x8x128xf32, #tpu.memory_space<vmem>>) attributes {dimension_semantics = [#tpu.dimension_semantics<parallel>], iteration_bounds = array<i64: 1>, scalar_prefetch = 0 : i64, scratch_operands = 0 : i64, tpu.core_type = #tpu.core_type<tc>, window_params = [{transform_indices = @transform_0, window_bounds = array<i64: 8, 128>}, {pipeline_mode = #tpu.pipeline_mode<synchronous>, transform_indices = @transform_1, window_bounds = array<i64: 128, 128>}, {pipeline_mode = #tpu.pipeline_mode<synchronous>, transform_indices = @transform_2, window_bounds = array<i64: 1, 128>}, {transform_indices = @transform_3, window_bounds = array<i64: 8, 128>}, {transform_indices = @transform_4, window_bounds = array<i64: 1, 8, 128>}]} {
    %c0 = arith.constant 0 : index
    %c0_0 = arith.constant 0 : index
    %0 = vector.load %arg1[%c0, %c0_0] : memref<8x128xbf16, #tpu.memory_space<vmem>>, vector<8x128xbf16>
    %c0_1 = arith.constant 0 : index
    %c0_2 = arith.constant 0 : index
    %1 = vector.load %arg2[%c0_1, %c0_2] : memref<128x128xbf16, #tpu.memory_space<vmem>>, vector<128x128xbf16>
    %cst = arith.constant dense<0.000000e+00> : vector<8x128xf32>
    %2 = tpu.matmul %0, %1, %cst {dimension_numbers = #tpu.dot_dimension_numbers<[1], [0], [0], [1], [0, 0, 1, 1], [], []>} : vector<8x128xbf16>, vector<128x128xbf16>, vector<8x128xf32> -> vector<8x128xf32>
    %c0_3 = arith.constant 0 : index
    %c0_4 = arith.constant 0 : index
    %3 = vector.load %arg3[%c0_3, %c0_4] : memref<1x128xf32, #tpu.memory_space<vmem>>, vector<1x128xf32>
    %4 = vector.broadcast %3 : vector<1x128xf32> to vector<8x128xf32>
    %5 = arith.addf %2, %4 : vector<8x128xf32>
    %c0_5 = arith.constant 0 : index
    %c0_6 = arith.constant 0 : index
    %6 = vector.load %arg4[%c0_5, %c0_6] : memref<8x128xf32, #tpu.memory_space<vmem>>, vector<8x128xf32>
    %7 = arith.subf %5, %6 : vector<8x128xf32>
    %8 = arith.mulf %7, %7 : vector<8x128xf32>
    %9 = vector.shape_cast %8 : vector<8x128xf32> to vector<1x8x128xf32>
    %cst_7 = arith.constant dense<0.000000e+00> : vector<8x128xf32>
    %10 = vector.multi_reduction <add>, %9, %cst_7 [0] : vector<1x8x128xf32> to vector<8x128xf32>
    %c0_8 = arith.constant 0 : index
    %c0_9 = arith.constant 0 : index
    %c0_10 = arith.constant 0 : index
    %11 = vector.load %arg5[%c0_8, %c0_9, %c0_10] : memref<1x8x128xf32, #tpu.memory_space<vmem>>, vector<1x8x128xf32>
    %12 = vector.shape_cast %11 : vector<1x8x128xf32> to vector<8x128xf32>
    %13 = vector.shape_cast %10 : vector<8x128xf32> to vector<1x8x128xf32>
    tpu.vector_store %arg5[%c0_8, %c0_9, %c0_10], %13 {strides = array<i32>} : memref<1x8x128xf32, #tpu.memory_space<vmem>>, vector<1x8x128xf32>,
    return
  }
  func.func @transform_0(%arg0: i32) -> (i32, i32) {
    %c0_i32 = arith.constant 0 : i32
    %c0_i32_0 = arith.constant 0 : i32
    return %arg0, %c0_i32 : i32, i32
  }
  func.func @transform_1(%arg0: i32) -> (i32, i32) {
    %c0_i32 = arith.constant 0 : i32
    %c0_i32_0 = arith.constant 0 : i32
    %c0_i32_1 = arith.constant 0 : i32
    return %c0_i32, %c0_i32_0 : i32, i32
  }
  func.func @transform_2(%arg0: i32) -> (i32, i32) {
    %c0_i32 = arith.constant 0 : i32
    %c0_i32_0 = arith.constant 0 : i32
    %c0_i32_1 = arith.constant 0 : i32
    return %c0_i32, %c0_i32_0 : i32, i32
  }
  func.func @transform_3(%arg0: i32) -> (i32, i32) {
    %c0_i32 = arith.constant 0 : i32
    %c0_i32_0 = arith.constant 0 : i32
    return %arg0, %c0_i32 : i32, i32
  }
  func.func @transform_4(%arg0: i32) -> (i32, i32, i32) {
    %c0_i32 = arith.constant 0 : i32
    %c0_i32_0 = arith.constant 0 : i32
    %c0_i32_1 = arith.constant 0 : i32
    return %arg0, %c0_i32, %c0_i32_0 : i32, i32, i32
  }
}

</mosaic_0001>

<llo_original>
// kernel: tpu_custom_call.1
$region0: #{tpu_custom_call.1}
  #allocation0 [shape = 'u32[]', space=smem, size = 0x4, offset = 0x4, fixed_abs, tag = 'smem constant byte address 0x4 - core index']
  #allocation1 [shape = 'u32[144,128]{1,0:T(1,128)}', space=vmem, size = 0x12000, scoped, tag = 'internal scratch']
  %s0 = inlined_call_operand.hbm [shape: bf16[8,128], index: 0, kind: input, shape index: {}]
  %s1 = inlined_call_operand.hbm [shape: bf16[128,128], index: 1, kind: input, shape index: {}]
  %s2 = inlined_call_operand.hbm [shape: f32[1,128], index: 2, kind: input, shape index: {}]
  %s3 = inlined_call_operand.hbm [shape: f32[8,128], index: 3, kind: input, shape index: {}]
  %s4 = inlined_call_operand.hbm [shape: f32[1,8,128], index: 4, kind: output, shape index: {}]
  %s5 = sld [smem:[#allocation0]]
  $region42: #{tpu_custom_call.1} parent=0
    _
  %s7 = ssub.s32 1, %s5
  %s8 = scalar_select 0, %s7, %s5
  $region1: #{tpu_custom_call.1} parent=0
    #allocation2 [shape = 'u8[2048]{0}', space=vmem, size = 0x800, scoped, tag = 'input window, operand 0, single buffered']
    #allocation3 [shape = 's32[1]{0}', space=sflag, size = 0x4, scoped, tag = 'scoped memory for tpu_custom_call.1']
    #allocation4 [shape = 's32[1]{0}', space=sflag, size = 0x4, scoped, tag = 'scoped memory for tpu_custom_call.1']
    #allocation5 [shape = 'u8[32768]{0}', space=vmem, size = 0x8000, scoped, tag = 'input window, operand 1, single buffered']
    #allocation6 [shape = 's32[1]{0}', space=sflag, size = 0x4, scoped, tag = 'scoped memory for tpu_custom_call.1']
    #allocation7 [shape = 'u8[512]{0}', space=vmem, size = 0x400, scoped, tag = 'input window, operand 2, single buffered']
    #allocation8 [shape = 'u8[4096]{0}', space=vmem, size = 0x1000, scoped, tag = 'input window, operand 3, single buffered']
    #allocation9 [shape = 's32[1]{0}', space=sflag, size = 0x4, scoped, tag = 'scoped memory for tpu_custom_call.1']
    #allocation10 [shape = 'u8[4096]{0}', space=vmem, size = 0x1000, scoped, tag = 'output window, operand 0, single buffered']
    %9 = vsyncpa [#allocation3], 0
    %10 = vsyncpa [#allocation6], 0
    %11 = vsyncpa [#allocation9], 0
    %12 = vsyncpa [#allocation4], 0
    // Predicated region
    $region2: #{tpu_custom_call.1} parent=1 // pred_check
      _
    $region3: #{tpu_custom_call.1} parent=1 // pred_check_branch
      %14 = sbr.rel (0) target = $region5
    $region4: #{tpu_custom_call.1} parent=1 // pred_region
      %s16 = ssub.s32 64, 64
      %17 = vsyncadd [#allocation3], %s16
      %s19 = sshll.u32 [#allocation2], 4
      %s20 = int_to_ptr.vmem [resolvable:$true] %s19
      %22 = dma.hbm_to_vmem [thread:$0]  %s0, 64, %s20, [#allocation3]
    $region5: #{tpu_custom_call.1} parent=1 // pred_fallthru
      _
    // Predicated region
    $region6: #{tpu_custom_call.1} parent=1 // pred_check
      _
    $region7: #{tpu_custom_call.1} parent=1 // pred_check_branch
      %24 = sbr.rel (0) target = $region9
    $region8: #{tpu_custom_call.1} parent=1 // pred_region
      %s26 = ssub.s32 1024, 1024
      %27 = vsyncadd [#allocation6], %s26
      %s28 = sshll.u32 [#allocation5], 4
      %s29 = int_to_ptr.vmem [resolvable:$true] %s28
      %34 = dma.hbm_to_vmem [thread:$0]  %s1, 1024, %s29, [#allocation6], 64, 64, 4
    $region9: #{tpu_custom_call.1} parent=1 // pred_fallthru
      _
    // Predicated region
    $region10: #{tpu_custom_call.1} parent=1 // pred_check
      _
    $region11: #{tpu_custom_call.1} parent=1 // pred_check_branch
      %36 = sbr.rel (0) target = $region13
    $region12: #{tpu_custom_call.1} parent=1 // pred_region
      %s38 = ssub.s32 16, 16
      %39 = vsyncadd [#allocation6], %s38
      %s41 = sshll.u32 [#allocation7], 4
      %s42 = int_to_ptr.vmem [resolvable:$true] %s41
      %44 = dma.hbm_to_vmem [thread:$0]  %s2, 16, %s42, [#allocation6]
    $region13: #{tpu_custom_call.1} parent=1 // pred_fallthru
      _
    // Predicated region
    $region14: #{tpu_custom_call.1} parent=1 // pred_check
      _
    $region15: #{tpu_custom_call.1} parent=1 // pred_check_branch
      %46 = sbr.rel (0) target = $region17
    $region16: #{tpu_custom_call.1} parent=1 // pred_region
      %s48 = ssub.s32 128, 128
      %49 = vsyncadd [#allocation9], %s48
      %s51 = sshll.u32 [#allocation8], 4
      %s52 = int_to_ptr.vmem [resolvable:$true] %s51
      %54 = dma.hbm_to_vmem [thread:$0]  %s3, 128, %s52, [#allocation9]
    $region17: #{tpu_custom_call.1} parent=1 // pred_fallthru
      _
    // Predicated region
    $region18: #{tpu_custom_call.1} parent=1 // pred_check
      _
    $region19: #{tpu_custom_call.1} parent=1 // pred_check_branch
      %56 = sbr.rel (0) target = $region21
    $region20: #{tpu_custom_call.1} parent=1 // pred_region
      %57 = dma.done [#allocation3], 64
    $region21: #{tpu_custom_call.1} parent=1 // pred_fallthru
      _
    // Predicated region
    $region22: #{tpu_custom_call.1} parent=1 // pred_check
      _
    $region23: #{tpu_custom_call.1} parent=1 // pred_check_branch
      %59 = sbr.rel (0) target = $region25
    $region24: #{tpu_custom_call.1} parent=1 // pred_region
      %60 = dma.done [#allocation6], 1024
    $region25: #{tpu_custom_call.1} parent=1 // pred_fallthru
      _
    // Predicated region
    $region26: #{tpu_custom_call.1} parent=1 // pred_check
      _
    $region27: #{tpu_custom_call.1} parent=1 // pred_check_branch
      %62 = sbr.rel (0) target = $region29
    $region28: #{tpu_custom_call.1} parent=1 // pred_region
      %63 = dma.done [#allocation6], 16
    $region29: #{tpu_custom_call.1} parent=1 // pred_fallthru
      _
    // Predicated region
    $region30: #{tpu_custom_call.1} parent=1 // pred_check
      _
    $region31: #{tpu_custom_call.1} parent=1 // pred_check_branch
      %65 = sbr.rel (0) target = $region33
    $region32: #{tpu_custom_call.1} parent=1 // pred_region
      %66 = dma.done [#allocation9], 128
    $region33: #{tpu_custom_call.1} parent=1 // pred_fallthru
      _
    %v68 = vld [vmem:[#allocation2] sm:$0xf]
    %v69 = vld [vmem:[#allocation5] sm:$0xf]
    %v70 = vld [vmem:[#allocation5 + $0x4] sm:$0xf]
    %v71 = vld [vmem:[#allocation5 + $0x8] sm:$0xf]
    %v72 = vld [vmem:[#allocation5 + $0xc] sm:$0xf]
    %v73 = vld [vmem:[#allocation5 + $0x10] sm:$0xf]
    %v74 = vld [vmem:[#allocation5 + $0x14] sm:$0xf]
    %v75 = vld [vmem:[#allocation5 + $0x18] sm:$0xf]
    %v76 = vld [vmem:[#allocation5 + $0x1c] sm:$0xf]
    %v77 = vld [vmem:[#allocation5 + $0x20] sm:$0xf]
    %v78 = vld [vmem:[#allocation5 + $0x24] sm:$0xf]
    %v79 = vld [vmem:[#allocation5 + $0x28] sm:$0xf]
    %v80 = vld [vmem:[#allocation5 + $0x2c] sm:$0xf]
    %v81 = vld [vmem:[#allocation5 + $0x30] sm:$0xf]
    %v82 = vld [vmem:[#allocation5 + $0x34] sm:$0xf]
    %v83 = vld [vmem:[#allocation5 + $0x38] sm:$0xf]
    %v84 = vld [vmem:[#allocation5 + $0x3c] sm:$0xf]
    %v85 = vld [vmem:[#allocation7] sm:$0x1]
    %v87 = vlaneseq
    %v88 = vshrl.u32 %v87, 7
    %v89 = vsub.s32 0, %v88
    %v90 = vrot.slane %v85, %v89
    %v108 = vunpack.c.l.b16 %v69
    %v109 = vunpack.c.l.b16 %v70
    %v110 = vunpack.c.l.b16 %v71
    %v111 = vunpack.c.l.b16 %v72
    %v112 = vunpack.c.l.b16 %v73
    %v113 = vunpack.c.l.b16 %v74
    %v114 = vunpack.c.l.b16 %v75
    %v115 = vunpack.c.l.b16 %v76
    %v116 = vunpack.c.l.b16 %v77
    %v117 = vunpack.c.l.b16 %v78
    %v118 = vunpack.c.l.b16 %v79
    %v119 = vunpack.c.l.b16 %v80
    %v120 = vunpack.c.l.b16 %v81
    %v121 = vunpack.c.l.b16 %v82
    %v122 = vunpack.c.l.b16 %v83
    %v123 = vunpack.c.l.b16 %v84
    %v124 = vpack.c.b16 %v109, %v108
    %v125 = vpack.c.b16 %v111, %v110
    %v126 = vpack.c.b16 %v113, %v112
    %v127 = vpack.c.b16 %v115, %v114
    %v128 = vpack.c.b16 %v117, %v116
    %v129 = vpack.c.b16 %v119, %v118
    %v130 = vpack.c.b16 %v121, %v120
    %v131 = vpack.c.b16 %v123, %v122
    %140 = vmatprep.subr.bf16.mxu0 0
    %141 = vmatpush1.bf16.msra.mxu0 %v124
    %142 = vmatprep.subr.bf16.mxu0 0
    %143 = vmatpush1.bf16.msra.mxu0 %v125
    %144 = vmatprep.subr.bf16.mxu0 0
    %145 = vmatpush1.bf16.msra.mxu0 %v126
    %146 = vmatprep.subr.bf16.mxu0 0
    %147 = vmatpush1.bf16.msra.mxu0 %v127
    %148 = vmatprep.subr.bf16.mxu0 0
    %149 = vmatpush1.bf16.msra.mxu0 %v128
    %150 = vmatprep.subr.bf16.mxu0 0
    %151 = vmatpush1.bf16.msra.mxu0 %v129
    %152 = vmatprep.subr.bf16.mxu0 0
    %153 = vmatpush1.bf16.msra.mxu0 %v130
    %154 = vmatprep.subr.bf16.mxu0 0
    %155 = vmatpush1.bf16.msra.mxu0 %v131
    %156 = vmatprep.subr.bf16.mxu0 0
    %157 = vmatpush1.bf16.msra.mxu0 0
    %158 = vmatprep.subr.bf16.mxu0 0
    %159 = vmatpush1.bf16.msra.mxu0 0
    %160 = vmatprep.subr.bf16.mxu0 0
    %161 = vmatpush1.bf16.msra.mxu0 0
    %162 = vmatprep.subr.bf16.mxu0 0
    %163 = vmatpush1.bf16.msra.mxu0 0
    %164 = vmatprep.subr.bf16.mxu0 0
    %165 = vmatpush1.bf16.msra.mxu0 0
    %166 = vmatprep.subr.bf16.mxu0 0
    %167 = vmatpush1.bf16.msra.mxu0 0
    %168 = vmatprep.subr.bf16.mxu0 0
    %169 = vmatpush1.bf16.msra.mxu0 0
    %170 = vmatprep.subr.bf16.mxu0 0
    %171 = vmatpush1.bf16.msra.mxu0 0
    %172 = vmatprep.mubr.bf16.mxu0 0
    %173 = vmatmul.mubr.bf16.gmra.mrb[0].mxu0 %v68
    %v174 = vpop.f32.mrb[0].mxu0
    %v175 = vadd.f32 %v90, %v174
    %v176 = vpop.f32.mrb[0].mxu0
    %v177 = vpop.f32.mrb[0].mxu0
    %v178 = vpop.f32.mrb[0].mxu0
    %179 = vdwg.mxu0
    %v180 = vld [vmem:[#allocation8] sm:$0xff]
    %v181 = vsub.f32 %v175, %v180
    %v182 = vmul.f32 %v181, %v181
    %v183 = vadd.f32 %v182, 0.0
    %184 = vst [vmem:[#allocation10] sm:$0xff] %v183
    // Predicated region
    $region34: #{tpu_custom_call.1} parent=1 // pred_check
      _
    $region35: #{tpu_custom_call.1} parent=1 // pred_check_branch
      %186 = sbr.rel (0) target = $region37
    $region36: #{tpu_custom_call.1} parent=1 // pred_region
      %s188 = ssub.s32 128, 128
      %189 = vsyncadd [#allocation4], %s188
      %s191 = sshll.u32 [#allocation10], 4
      %s192 = int_to_ptr.vmem [resolvable:$true] %s191
      %194 = dma.vmem_to_hbm [thread:$0]  %s192, 128, %s4, [#allocation4]
    $region37: #{tpu_custom_call.1} parent=1 // pred_fallthru
      _
    // Predicated region
    $region38: #{tpu_custom_call.1} parent=1 // pred_check
      _
    $region39: #{tpu_custom_call.1} parent=1 // pred_check_branch
      %196 = sbr.rel (0) target = $region41
    $region40: #{tpu_custom_call.1} parent=1 // pred_region
      %197 = dma.done [#allocation4], 128
    $region41: #{tpu_custom_call.1} parent=1 // pred_fallthru
      _
    %198 = vsyncpa [#allocation3], 1
    %199 = vsyncpa [#allocation6], 1
    %200 = vsyncpa [#allocation9], 1
    %201 = vsyncpa [#allocation4], 1

</llo_original>
